<compile_context>
chip_gen: v5e
topology: v5e:2x2
jax: 0.10.0
libtpu: 0.0.40
codegen_flags: <defaults>
</compile_context>

<pallas_src>
import math

import jax
import jax.numpy as jnp
from jax.experimental import pallas as pl
from jax.experimental.pallas import tpu as pltpu

# ---------------- configuration (mirrors NGCNet.__init__ arg dict) ----------
DIM_CODE = 32            # arg['dim_code']
DIM_FEAT = 32            # arg['dim_feat']
N_CURVE = 16             # arg['n_curve']
NUM_PE = 4               # arg['num_pos_encoding']
D_SAMPLE = 3             # samples are 3-D points
D_PE = D_SAMPLE * (2 * NUM_PE + 1)          # PosEncoding d_out = 27
ENC_HIDDEN = 64          # encoder_curve MLP: [DIM_FEAT, 64, DIM_FEAT]
DEC_HIDDEN = 64          # decoder_curve MLP: [DIM_FEAT + D_PE, 64, 64, 1]
D_STREAM = 8             # packed per-row stream: [idx, t, x, y, z, 0, 0, 0]

NB, NS = 2, 8            # batch, samples per curve (small test shapes)
MAX_TILE = 2048          # rows per grid step (v5e/v6e amortization, v7x VMEM cap)


def _round_up(x, m):
    return (x + m - 1) // m * m


# ---------------- Pallas kernel ---------------------------------------------
def ngcnet_kernel(iv_ref, embdw1_ref, we1_ref, wcat_ref, wd2_ref, bias_ref,
                  sdf_ref):
    f32 = jnp.float32
    bf16 = jnp.bfloat16

    # bias / small-vector slab (packed wrapper-side, one (8,128) vreg tile):
    b1 = bias_ref[0:1, :2 * DIM_FEAT]       # fused linear1 bias
    be1 = bias_ref[1:2, :ENC_HIDDEN]        # encoder hidden bias
    bd1p = bias_ref[2:3, :DEC_HIDDEN]       # folded decoder-1 bias
    bd2 = bias_ref[3:4, :DEC_HIDDEN]        # decoder-2 bias
    wd3r = bias_ref[4:5, :DEC_HIDDEN]       # final projection as a row
    bd3 = bias_ref[5:6, 0:1]                # final scalar bias

    iv = iv_ref[...]                        # [T, 8] packed [idx|t|xyz|pad]
    idx = iv[:, 0:1].astype(jnp.int32)      # curve indices are small ints,
    t = iv[:, 1:2]                          # exactly representable in f32
    x = iv[:, 2:2 + D_SAMPLE]               # [T, 3]

    # One-hot against the folded (embd @ linear1) table: the embedding gather
    # and linear1 are ONE K=16 bf16 matmul producing both curve endpoints.
    hot = (idx == jax.lax.broadcasted_iota(jnp.int32, (1, N_CURVE), 1)
           ).astype(bf16)                                            # [T, 16]
    ef = jnp.dot(hot, embdw1_ref[...], preferred_element_type=f32) + b1
    feat = t * ef[:, :DIM_FEAT] + (1.0 - t) * ef[:, DIM_FEAT:]       # [T, 32]

    # encoder hidden layer (ReLU).
    h = jnp.maximum(
        jnp.dot(feat.astype(bf16), we1_ref[...],
                preferred_element_type=f32) + be1, 0.0)              # [T, 64]

    # NeRF positional encoding: ONE batched EUP sin over [T, 2*3*NUM_PE]
    # (freq-major), cos obtained as sin(x + pi/2).
    xt = jnp.concatenate([x * (2.0 ** i) for i in range(NUM_PE)], axis=-1)
    sc = jnp.sin(jnp.concatenate([xt, xt + (0.5 * math.pi)], axis=-1))  # [T, 24]

    # Decoder layer 1 as a single matmul over [h | x | sin | cos] against the
    # pre-packed [we2 @ wd1f ; wd1s] weight (encoder output layer folded in).
    hp = jnp.concatenate([h, x, sc], axis=-1).astype(bf16)           # [T, 91]
    d = jnp.maximum(
        jnp.dot(hp, wcat_ref[...], preferred_element_type=f32) + bd1p, 0.0)
    d = jnp.maximum(
        jnp.dot(d.astype(bf16), wd2_ref[...],
                preferred_element_type=f32) + bd2, 0.0)              # [T, 64]

    # Final [*,64]x[64,1]: VPU multiply + lane reduction (skip a 1-column MXU
    # pass sitting on the epilogue critical path).  NOTE: when N is not a
    # multiple of the tile, the trailing padded rows compute garbage here but
    # are masked on writeback by the BlockSpec pipeline.
    sdf_ref[...] = jnp.sum(d * wd3r, axis=-1, keepdims=True) + bd3


# ---------------- wrapper-side weight prep (fusions / folds / packing) -------
def _prep_operands(params):
    f32, bf16 = jnp.float32, jnp.bfloat16

    w1, b1 = params["w1"], params["b1"]
    # De-interleave linear1's .view(..., dim_feat, 2) layout into [end_a | end_b].
    w1f = jnp.concatenate([w1[:, 0::2], w1[:, 1::2]], axis=1)      # [DIM_CODE, 2*DIM_FEAT]
    b1f = jnp.concatenate([b1[0::2], b1[1::2]], axis=0)            # [2*DIM_FEAT]
    # Fold the embedding table into linear1: one-hot @ (embd @ w1f).
    embdw1 = params["embd"] @ w1f                                  # [N_CURVE, 2*DIM_FEAT]

    wd1f = params["wd1"][:DIM_FEAT]                                # [DIM_FEAT, DEC_HIDDEN]
    wd1s = params["wd1"][DIM_FEAT:]                                # [D_PE, DEC_HIDDEN]
    wed = params["we2"] @ wd1f                                     # fold encoder out layer
    bd1p = params["be2"] @ wd1f + params["bd1"]                    # folded bias
    wcat = jnp.concatenate([wed, wd1s], axis=0)                    # [ENC_HIDDEN + D_PE, 64]
    wd3r = params["wd3"][:, 0]                                     # [DEC_HIDDEN]

    slab = jnp.zeros((8, 128), f32)                                # one (8,128) vreg tile
    slab = slab.at[0, :b1f.shape[0]].set(b1f)
    slab = slab.at[1, :params["be1"].shape[0]].set(params["be1"])
    slab = slab.at[2, :DEC_HIDDEN].set(bd1p)
    slab = slab.at[3, :DEC_HIDDEN].set(params["bd2"])
    slab = slab.at[4, :DEC_HIDDEN].set(wd3r)
    slab = slab.at[5, 0].set(params["bd3"][0])

    # MXU operands in bf16 (f32 accumulation inside the kernel).
    return (embdw1.astype(bf16), params["we1"].astype(bf16),
            wcat.astype(bf16), params["wd2"].astype(bf16), slab)


# ---------------- forward ----------------------------------------------------
@jax.jit
def ngcnet_forward(params, curve_idx, coords, samples):
    """curve_idx: [Nb,Ns] int32, coords: [Nb,Ns] f32, samples: [Nb,Ns,3] f32."""
    Nb, Ns = curve_idx.shape
    N = Nb * Ns
    # >= 2 grid tiles so v7x can shard the "parallel" row axis over its 2 TCs.
    tile = min(MAX_TILE, _round_up(pl.cdiv(N, 2), 8))
    n_tiles = pl.cdiv(N, tile)

    # One lane-dense per-row stream: [idx (as float), t, x, y, z, 0, 0, 0].
    iv = jnp.concatenate(
        [curve_idx.reshape(N, 1).astype(jnp.float32),
         coords.reshape(N, 1).astype(jnp.float32),
         samples.reshape(N, D_SAMPLE).astype(jnp.float32),
         jnp.zeros((N, D_STREAM - 2 - D_SAMPLE), jnp.float32)],
        axis=-1)                                                    # [N, 8]

    embdw1, we1, wcat, wd2, bias = _prep_operands(params)

    row = lambda i: (i, 0)       # row-tiled, pipelined streams
    rep = lambda i: (0, 0)       # VMEM-resident weights (same block every step)

    flops = N * 2 * (N_CURVE * 2 * DIM_FEAT + DIM_FEAT * ENC_HIDDEN
                     + (ENC_HIDDEN + D_PE) * DEC_HIDDEN
                     + DEC_HIDDEN * DEC_HIDDEN + DEC_HIDDEN)
    weight_bytes = 2 * (embdw1.size + we1.size + wcat.size + wd2.size) + 4 * bias.size
    bytes_accessed = N * 4 * (D_STREAM + 1) + weight_bytes

    sdf = pl.pallas_call(
        ngcnet_kernel,
        out_shape=jax.ShapeDtypeStruct((N, 1), jnp.float32),
        grid=(n_tiles,),
        in_specs=[
            pl.BlockSpec((tile, D_STREAM), row),         # packed [idx|t|xyz]
            pl.BlockSpec(embdw1.shape, rep),             # embd @ linear1 (fused)
            pl.BlockSpec(we1.shape, rep),                # encoder hidden
            pl.BlockSpec(wcat.shape, rep),               # [we2@wd1f ; wd1s]
            pl.BlockSpec(wd2.shape, rep),                # decoder hidden
            pl.BlockSpec(bias.shape, rep),               # packed bias slab
        ],
        out_specs=pl.BlockSpec((tile, 1), row),
        compiler_params=pltpu.CompilerParams(
            dimension_semantics=("parallel",)),
        cost_estimate=pl.CostEstimate(
            flops=flops,
            transcendentals=N * 2 * NUM_PE * D_SAMPLE,
            bytes_accessed=bytes_accessed),
    )(iv, embdw1, we1, wcat, wd2, bias)

    # Returned 'code' is the exact f32 embedding rows (as in PyTorch); the
    # kernel re-derives the selection internally via the one-hot fold, so it
    # never reads this array back from HBM.
    curve_code = params["embd"][curve_idx]
    return {"sdf": sdf.reshape(Nb, Ns), "code": curve_code}


# ---------------- deterministic parameter init (PyTorch-style layouts) -------
def init_params(key):
    ks = jax.random.split(key, 8)

    def lin(k, fan_in, fan_out):
        bound = 1.0 / math.sqrt(fan_in)
        kw, kb = jax.random.split(k)
        w = jax.random.uniform(kw, (fan_in, fan_out), jnp.float32, -bound, bound)
        b = jax.random.uniform(kb, (fan_out,), jnp.float32, -bound, bound)
        return w, b

    embd = jax.random.normal(ks[0], (N_CURVE, DIM_CODE), jnp.float32) / math.sqrt(DIM_CODE)
    w1, b1 = lin(ks[1], DIM_CODE, 2 * DIM_FEAT)          # interleaved endpoint layout
    we1, be1 = lin(ks[2], DIM_FEAT, ENC_HIDDEN)
    we2, be2 = lin(ks[3], ENC_HIDDEN, DIM_FEAT)
    wd1, bd1 = lin(ks[4], DIM_FEAT + D_PE, DEC_HIDDEN)
    wd2, bd2 = lin(ks[5], DEC_HIDDEN, DEC_HIDDEN)
    wd3, bd3 = lin(ks[6], DEC_HIDDEN, 1)

    return dict(embd=embd, w1=w1, b1=b1, we1=we1, be1=be1, we2=we2, be2=be2,
                wd1=wd1, bd1=bd1, wd2=wd2, bd2=bd2, wd3=wd3, bd3=bd3)


# ---------------- pure-JAX reference (unfused, f32, for correctness) ---------
def ngcnet_reference(p, curve_idx, coords, samples):
    Nb, Ns = curve_idx.shape
    code = p["embd"][curve_idx]
    ef = code @ p["w1"] + p["b1"]
    end = ef.reshape(Nb, Ns, DIM_FEAT, 2)
    w = jnp.stack([coords, 1.0 - coords], axis=-1)
    feat = jnp.einsum("bnjk,bnk->bnj", end, w)
    h = jnp.maximum(feat @ p["we1"] + p["be1"], 0.0)
    enc = h @ p["we2"] + p["be2"]
    x = samples
    freqs = 2.0 ** jnp.arange(NUM_PE, dtype=jnp.float32)
    xf = x[..., None, :] * freqs[None, None, :, None]
    pe = jnp.concatenate(
        [x, jnp.sin(xf).reshape(Nb, Ns, -1), jnp.cos(xf).reshape(Nb, Ns, -1)],
        axis=-1)
    cat = jnp.concatenate([enc, pe], axis=-1)
    d = jnp.maximum(cat @ p["wd1"] + p["bd1"], 0.0)
    d = jnp.maximum(d @ p["wd2"] + p["bd2"], 0.0)
    sdf = (d @ p["wd3"] + p["bd3"])[..., 0]
    return sdf


if __name__ == "__main__":
    key = jax.random.PRNGKey(0)
    kp, ki, kc, ksamp = jax.random.split(key, 4)

    params = init_params(kp)
    curve_idx = jax.random.randint(ki, (NB, NS), 0, N_CURVE, dtype=jnp.int32)
    coords = jax.random.uniform(kc, (NB, NS), jnp.float32)
    samples = jax.random.normal(ksamp, (NB, NS, D_SAMPLE), jnp.float32)

    out = ngcnet_forward(params, curve_idx, coords, samples)
    jax.block_until_ready(out)

    ref_sdf = ngcnet_reference(params, curve_idx, coords, samples)
    assert out["sdf"].shape == (NB, NS)
    assert out["code"].shape == (NB, NS, DIM_CODE)
    assert jnp.allclose(out["code"], params["embd"][curve_idx])
    # Tolerance loosened from 1e-3 to accommodate bf16 MXU operands
    # (f32 accumulation) per the performance review.
    assert jnp.allclose(out["sdf"], ref_sdf, atol=2e-2, rtol=2e-2), (
        float(jnp.max(jnp.abs(out["sdf"] - ref_sdf))))

    print("KERNEL_OK")
</pallas_src>

<mosaic_0001>
module attributes {stable_mosaic.version = 11 : i64} {
  func.func @ngcnet_kernel(%arg0: i32, %arg1: memref<8x8xf32, #tpu.memory_space<vmem>>, %arg2: memref<16x64xbf16, #tpu.memory_space<vmem>>, %arg3: memref<32x64xbf16, #tpu.memory_space<vmem>>, %arg4: memref<91x64xbf16, #tpu.memory_space<vmem>>, %arg5: memref<64x64xbf16, #tpu.memory_space<vmem>>, %arg6: memref<8x128xf32, #tpu.memory_space<vmem>>, %arg7: memref<8x1xf32, #tpu.memory_space<vmem>>) attributes {dimension_semantics = [#tpu.dimension_semantics<parallel>], iteration_bounds = array<i64: 2>, scalar_prefetch = 0 : i64, scratch_operands = 0 : i64, tpu.core_type = #tpu.core_type<tc>, window_params = [{transform_indices = @transform_0, window_bounds = array<i64: 8, 8>}, {pipeline_mode = #tpu.pipeline_mode<synchronous>, transform_indices = @transform_1, window_bounds = array<i64: 16, 64>}, {pipeline_mode = #tpu.pipeline_mode<synchronous>, transform_indices = @transform_2, window_bounds = array<i64: 32, 64>}, {pipeline_mode = #tpu.pipeline_mode<synchronous>, transform_indices = @transform_3, window_bounds = array<i64: 91, 64>}, {pipeline_mode = #tpu.pipeline_mode<synchronous>, transform_indices = @transform_4, window_bounds = array<i64: 64, 64>}, {pipeline_mode = #tpu.pipeline_mode<synchronous>, transform_indices = @transform_5, window_bounds = array<i64: 8, 128>}, {transform_indices = @transform_6, window_bounds = array<i64: 8, 1>}]} {
    %c0 = arith.constant 0 : index
    %c0_0 = arith.constant 0 : index
    %0 = vector.load %arg6[%c0, %c0_0] : memref<8x128xf32, #tpu.memory_space<vmem>>, vector<1x64xf32>
    %c1 = arith.constant 1 : index
    %c0_1 = arith.constant 0 : index
    %1 = vector.load %arg6[%c1, %c0_1] : memref<8x128xf32, #tpu.memory_space<vmem>>, vector<1x64xf32>
    %c2 = arith.constant 2 : index
    %c0_2 = arith.constant 0 : index
    %2 = vector.load %arg6[%c2, %c0_2] : memref<8x128xf32, #tpu.memory_space<vmem>>, vector<1x64xf32>
    %c3 = arith.constant 3 : index
    %c0_3 = arith.constant 0 : index
    %3 = vector.load %arg6[%c3, %c0_3] : memref<8x128xf32, #tpu.memory_space<vmem>>, vector<1x64xf32>
    %c4 = arith.constant 4 : index
    %c0_4 = arith.constant 0 : index
    %4 = vector.load %arg6[%c4, %c0_4] : memref<8x128xf32, #tpu.memory_space<vmem>>, vector<1x64xf32>
    %c5 = arith.constant 5 : index
    %c0_5 = arith.constant 0 : index
    %5 = vector.load %arg6[%c5, %c0_5] : memref<8x128xf32, #tpu.memory_space<vmem>>, vector<1x1xf32>
    %c0_6 = arith.constant 0 : index
    %c0_7 = arith.constant 0 : index
    %6 = vector.load %arg1[%c0_6, %c0_7] : memref<8x8xf32, #tpu.memory_space<vmem>>, vector<8x8xf32>
    %7 = vector.extract_strided_slice %6 {offsets = [0, 0], sizes = [8, 1], strides = [1, 1]} : vector<8x8xf32> to vector<8x1xf32>
    %8 = arith.fptosi %7 : vector<8x1xf32> to vector<8x1xi32>
    %9 = vector.extract_strided_slice %6 {offsets = [0, 1], sizes = [8, 1], strides = [1, 1]} : vector<8x8xf32> to vector<8x1xf32>
    %10 = vector.extract_strided_slice %6 {offsets = [0, 2], sizes = [8, 3], strides = [1, 1]} : vector<8x8xf32> to vector<8x3xf32>
    %11 = tpu.iota {dimensions = array<i32: 1>} : vector<1x16xi32>
    %12 = vector.broadcast %8 : vector<8x1xi32> to vector<8x16xi32>
    %13 = vector.broadcast %11 : vector<1x16xi32> to vector<8x16xi32>
    %14 = arith.cmpi eq, %12, %13 : vector<8x16xi32>
    %15 = arith.extui %14 : vector<8x16xi1> to vector<8x16xi32>
    %16 = arith.sitofp %15 : vector<8x16xi32> to vector<8x16xf32>
    %17 = arith.truncf %16 : vector<8x16xf32> to vector<8x16xbf16>
    %c0_8 = arith.constant 0 : index
    %c0_9 = arith.constant 0 : index
    %18 = vector.load %arg2[%c0_8, %c0_9] : memref<16x64xbf16, #tpu.memory_space<vmem>>, vector<16x64xbf16>
    %cst = arith.constant dense<0.000000e+00> : vector<8x64xf32>
    %19 = tpu.matmul %17, %18, %cst {dimension_numbers = #tpu.dot_dimension_numbers<[1], [0], [0], [1], [0, 0, 1, 1], [], []>} : vector<8x16xbf16>, vector<16x64xbf16>, vector<8x64xf32> -> vector<8x64xf32>
    %20 = vector.broadcast %0 : vector<1x64xf32> to vector<8x64xf32>
    %21 = arith.addf %19, %20 : vector<8x64xf32>
    %22 = vector.extract_strided_slice %21 {offsets = [0, 0], sizes = [8, 32], strides = [1, 1]} : vector<8x64xf32> to vector<8x32xf32>
    %23 = vector.broadcast %9 : vector<8x1xf32> to vector<8x32xf32>
    %24 = arith.mulf %23, %22 : vector<8x32xf32>
    %cst_10 = arith.constant 1.000000e+00 : f32
    %25 = vector.broadcast %cst_10 : f32 to vector<8x1xf32>
    %26 = arith.subf %25, %9 : vector<8x1xf32>
    %27 = vector.extract_strided_slice %21 {offsets = [0, 32], sizes = [8, 32], strides = [1, 1]} : vector<8x64xf32> to vector<8x32xf32>
    %28 = vector.broadcast %26 : vector<8x1xf32> to vector<8x32xf32>
    %29 = arith.mulf %28, %27 : vector<8x32xf32>
    %30 = arith.addf %24, %29 : vector<8x32xf32>
    %31 = arith.truncf %30 : vector<8x32xf32> to vector<8x32xbf16>
    %c0_11 = arith.constant 0 : index
    %c0_12 = arith.constant 0 : index
    %32 = vector.load %arg3[%c0_11, %c0_12] : memref<32x64xbf16, #tpu.memory_space<vmem>>, vector<32x64xbf16>
    %cst_13 = arith.constant dense<0.000000e+00> : vector<8x64xf32>
    %33 = tpu.matmul %31, %32, %cst_13 {dimension_numbers = #tpu.dot_dimension_numbers<[1], [0], [0], [1], [0, 0, 1, 1], [], []>} : vector<8x32xbf16>, vector<32x64xbf16>, vector<8x64xf32> -> vector<8x64xf32>
    %34 = vector.broadcast %1 : vector<1x64xf32> to vector<8x64xf32>
    %35 = arith.addf %33, %34 : vector<8x64xf32>
    %cst_14 = arith.constant 0.000000e+00 : f32
    %36 = vector.broadcast %cst_14 : f32 to vector<8x64xf32>
    %37 = arith.maximumf %35, %36 : vector<8x64xf32>
    %cst_15 = arith.constant 1.000000e+00 : f32
    %38 = vector.broadcast %cst_15 : f32 to vector<8x3xf32>
    %39 = arith.mulf %10, %38 : vector<8x3xf32>
    %cst_16 = arith.constant 2.000000e+00 : f32
    %40 = vector.broadcast %cst_16 : f32 to vector<8x3xf32>
    %41 = arith.mulf %10, %40 : vector<8x3xf32>
    %cst_17 = arith.constant 4.000000e+00 : f32
    %42 = vector.broadcast %cst_17 : f32 to vector<8x3xf32>
    %43 = arith.mulf %10, %42 : vector<8x3xf32>
    %cst_18 = arith.constant 8.000000e+00 : f32
    %44 = vector.broadcast %cst_18 : f32 to vector<8x3xf32>
    %45 = arith.mulf %10, %44 : vector<8x3xf32>
    %46 = tpu.concatenate %39, %41, %43, %45 in 1 : vector<8x3xf32>, vector<8x3xf32>, vector<8x3xf32>, vector<8x3xf32> -> vector<8x12xf32>
    %cst_19 = arith.constant 1.57079637 : f32
    %47 = vector.broadcast %cst_19 : f32 to vector<8x12xf32>
    %48 = arith.addf %46, %47 : vector<8x12xf32>
    %49 = tpu.concatenate %46, %48 in 1 : vector<8x12xf32>, vector<8x12xf32> -> vector<8x24xf32>
    %50 = math.sin %49 : vector<8x24xf32>
    %51 = tpu.concatenate %37, %10, %50 in 1 : vector<8x64xf32>, vector<8x3xf32>, vector<8x24xf32> -> vector<8x91xf32>
    %52 = arith.truncf %51 : vector<8x91xf32> to vector<8x91xbf16>
    %c0_20 = arith.constant 0 : index
    %c0_21 = arith.constant 0 : index
    %53 = vector.load %arg4[%c0_20, %c0_21] : memref<91x64xbf16, #tpu.memory_space<vmem>>, vector<91x64xbf16>
    %cst_22 = arith.constant dense<0.000000e+00> : vector<8x64xf32>
    %54 = tpu.matmul %52, %53, %cst_22 {dimension_numbers = #tpu.dot_dimension_numbers<[1], [0], [0], [1], [0, 0, 1, 1], [], []>} : vector<8x91xbf16>, vector<91x64xbf16>, vector<8x64xf32> -> vector<8x64xf32>
    %55 = vector.broadcast %2 : vector<1x64xf32> to vector<8x64xf32>
    %56 = arith.addf %54, %55 : vector<8x64xf32>
    %cst_23 = arith.constant 0.000000e+00 : f32
    %57 = vector.broadcast %cst_23 : f32 to vector<8x64xf32>
    %58 = arith.maximumf %56, %57 : vector<8x64xf32>
    %59 = arith.truncf %58 : vector<8x64xf32> to vector<8x64xbf16>
    %c0_24 = arith.constant 0 : index
    %c0_25 = arith.constant 0 : index
    %60 = vector.load %arg5[%c0_24, %c0_25] : memref<64x64xbf16, #tpu.memory_space<vmem>>, vector<64x64xbf16>
    %cst_26 = arith.constant dense<0.000000e+00> : vector<8x64xf32>
    %61 = tpu.matmul %59, %60, %cst_26 {dimension_numbers = #tpu.dot_dimension_numbers<[1], [0], [0], [1], [0, 0, 1, 1], [], []>} : vector<8x64xbf16>, vector<64x64xbf16>, vector<8x64xf32> -> vector<8x64xf32>
    %62 = vector.broadcast %3 : vector<1x64xf32> to vector<8x64xf32>
    %63 = arith.addf %61, %62 : vector<8x64xf32>
    %cst_27 = arith.constant 0.000000e+00 : f32
    %64 = vector.broadcast %cst_27 : f32 to vector<8x64xf32>
    %65 = arith.maximumf %63, %64 : vector<8x64xf32>
    %66 = vector.broadcast %4 : vector<1x64xf32> to vector<8x64xf32>
    %67 = arith.mulf %65, %66 : vector<8x64xf32>
    %cst_28 = arith.constant dense<0.000000e+00> : vector<8xf32>
    %68 = vector.multi_reduction <add>, %67, %cst_28 [1] : vector<8x64xf32> to vector<8xf32>
    %69 = vector.shape_cast %68 : vector<8xf32> to vector<8x1xf32>
    %70 = vector.broadcast %5 : vector<1x1xf32> to vector<8x1xf32>
    %71 = arith.addf %69, %70 : vector<8x1xf32>
    %c0_29 = arith.constant 0 : index
    %c0_30 = arith.constant 0 : index
    %72 = vector.load %arg7[%c0_29, %c0_30] : memref<8x1xf32, #tpu.memory_space<vmem>>, vector<8x1xf32>
    tpu.vector_store %arg7[%c0_29, %c0_30], %71 {strides = array<i32>} : memref<8x1xf32, #tpu.memory_space<vmem>>, vector<8x1xf32>,
    return
  }
  func.func @transform_0(%arg0: i32) -> (i32, i32) {
    %c0_i32 = arith.constant 0 : i32
    %c0_i32_0 = arith.constant 0 : i32
    return %arg0, %c0_i32 : i32, i32
  }
  func.func @transform_1(%arg0: i32) -> (i32, i32) {
    %c0_i32 = arith.constant 0 : i32
    %c0_i32_0 = arith.constant 0 : i32
    %c0_i32_1 = arith.constant 0 : i32
    return %c0_i32, %c0_i32_0 : i32, i32
  }
  func.func @transform_2(%arg0: i32) -> (i32, i32) {
    %c0_i32 = arith.constant 0 : i32
    %c0_i32_0 = arith.constant 0 : i32
    %c0_i32_1 = arith.constant 0 : i32
    return %c0_i32, %c0_i32_0 : i32, i32
  }
  func.func @transform_3(%arg0: i32) -> (i32, i32) {
    %c0_i32 = arith.constant 0 : i32
    %c0_i32_0 = arith.constant 0 : i32
    %c0_i32_1 = arith.constant 0 : i32
    return %c0_i32, %c0_i32_0 : i32, i32
  }
  func.func @transform_4(%arg0: i32) -> (i32, i32) {
    %c0_i32 = arith.constant 0 : i32
    %c0_i32_0 = arith.constant 0 : i32
    %c0_i32_1 = arith.constant 0 : i32
    return %c0_i32, %c0_i32_0 : i32, i32
  }
  func.func @transform_5(%arg0: i32) -> (i32, i32) {
    %c0_i32 = arith.constant 0 : i32
    %c0_i32_0 = arith.constant 0 : i32
    %c0_i32_1 = arith.constant 0 : i32
    return %c0_i32, %c0_i32_0 : i32, i32
  }
  func.func @transform_6(%arg0: i32) -> (i32, i32) {
    %c0_i32 = arith.constant 0 : i32
    %c0_i32_0 = arith.constant 0 : i32
    return %arg0, %c0_i32 : i32, i32
  }
}

</mosaic_0001>

<llo_original>
// kernel: ngcnet_forward.1
$region0: #{ngcnet_forward.1}
  #allocation0 [shape = 'u32[]', space=smem, size = 0x4, offset = 0x4, fixed_abs, tag = 'smem constant byte address 0x4 - core index']
  #allocation1 [shape = 'u32[72,128]{1,0:T(1,128)}', space=vmem, size = 0x9000, scoped, tag = 'internal scratch']
  %s0 = inlined_call_operand.vmem [shape: f32[16,8], index: 0, kind: input, shape index: {}]
  %s1 = inlined_call_operand.vmem [shape: bf16[16,64], index: 1, kind: input, shape index: {}]
  %s2 = inlined_call_operand.vmem [shape: bf16[32,64], index: 2, kind: input, shape index: {}]
  %s3 = inlined_call_operand.vmem [shape: bf16[91,64], index: 3, kind: input, shape index: {}]
  %s4 = inlined_call_operand.vmem [shape: bf16[64,64], index: 4, kind: input, shape index: {}]
  %s5 = inlined_call_operand.vmem [shape: f32[8,128], index: 5, kind: input, shape index: {}]
  %s6 = inlined_call_operand.vmem [shape: f32[16,1], index: 6, kind: output, shape index: {}]
  %s7 = sld [smem:[#allocation0]]
  $region57: #{ngcnet_forward.1} parent=0
    _
  %s9 = ssub.s32 1, %s7
  %s10 = scalar_select 0, %s9, %s7
  loop: start=0, step=1, limit=4
  $region2: #{ngcnet_forward.1} parent=0 // loop_pre_header
    _
  $region3: #{ngcnet_forward.1} parent=0 // loop_header
    %s12 = sphi 0, %s16
    %p13 = scmp.ge.s32.totalorder %s12, 4
    %s22 = sphi 0, %s24
    %s25 = sphi 0, %s22
    %s26 = sphi 0, %s25
    %s42 = sphi 0, %s26
    %s46 = sphi 0, %s46
    %s48 = sphi 0, %s46
    %s49 = sphi 0, %s48
    %s63 = sphi 0, %s49
    %s67 = sphi 0, %s67
    %s69 = sphi 0, %s67
    %s70 = sphi 0, %s69
    %s84 = sphi 0, %s70
    %s88 = sphi 0, %s88
    %s90 = sphi 0, %s88
    %s91 = sphi 0, %s90
    %s105 = sphi 0, %s91
    %s109 = sphi 0, %s109
    %s111 = sphi 0, %s109
    %s112 = sphi 0, %s111
    %s126 = sphi 0, %s112
    %s130 = sphi 0, %s130
    %s132 = sphi 0, %s130
    %s133 = sphi 0, %s132
    %s147 = sphi 0, %s133
    %s153 = sphi 0, %s155
    %s156 = sphi 0, %s153
    %s157 = sphi 0, %s156
    %s173 = sphi 0, %s157
  $region4: #{ngcnet_forward.1} parent=0 // loop_header_branch
    %15 = sbr.rel (%p13) target = $region8
  $region5: #{ngcnet_forward.1} parent=0 // loop_body
    %s17 = ssub.s32 %s12, 1
    %s18 = ssub.s32 %s12, 2
    %s19 = sadd.s32 %s12, 1
    %s20 = ssub.s32 %s12, %s19
    %p21 = scmp.eq.s32.totalorder %s20, 0
    %s23 = sadd.s32 %s22, 1
    %s24 = scalar_select %p21, %s22, %s23
    %p27 = pneg %p21
    %p28 = scmp.eq.s32.totalorder %s12, 1
    %p29 = por %p27, %p28
    %p30 = scmp.ne.s32.totalorder %s22, %s25
    %p31 = scmp.eq.s32.totalorder %s12, 0
    %p32 = por %p30, %p31
    %p33 = scmp.ne.s32.totalorder %s22, %s25
    %p34 = scmp.eq.s32.totalorder %s17, 1
    %p35 = por %p33, %p34
    %p36 = scmp.ne.s32.totalorder %s25, %s26
    %p37 = scmp.eq.s32.totalorder %s17, 0
    %p38 = por %p36, %p37
    %p39 = scmp.ne.s32.totalorder %s25, %s26
    %p40 = scmp.eq.s32.totalorder %s18, 1
    %p41 = por %p39, %p40
    %p43 = scmp.ne.s32.totalorder %s26, %s42
    %p44 = scmp.eq.s32.totalorder %s18, 0
    %p45 = por %p43, %p44
    %s47 = sadd.s32 %s46, 1
    %p50 = scmp.eq.s32.totalorder %s12, 1
    %p51 = scmp.ne.s32.totalorder %s46, %s48
    %p52 = scmp.eq.s32.totalorder %s12, 0
    %p53 = por %p51, %p52
    %p54 = scmp.ne.s32.totalorder %s46, %s48
    %p55 = scmp.eq.s32.totalorder %s17, 1
    %p56 = por %p54, %p55
    %p57 = scmp.ne.s32.totalorder %s48, %s49
    %p58 = scmp.eq.s32.totalorder %s17, 0
    %p59 = por %p57, %p58
    %p60 = scmp.ne.s32.totalorder %s48, %s49
    %p61 = scmp.eq.s32.totalorder %s18, 1
    %p62 = por %p60, %p61
    %p64 = scmp.ne.s32.totalorder %s49, %s63
    %p65 = scmp.eq.s32.totalorder %s18, 0
    %p66 = por %p64, %p65
    %s68 = sadd.s32 %s67, 1
    %p71 = scmp.eq.s32.totalorder %s12, 1
    %p72 = scmp.ne.s32.totalorder %s67, %s69
    %p73 = scmp.eq.s32.totalorder %s12, 0
    %p74 = por %p72, %p73
    %p75 = scmp.ne.s32.totalorder %s67, %s69
    %p76 = scmp.eq.s32.totalorder %s17, 1
    %p77 = por %p75, %p76
    %p78 = scmp.ne.s32.totalorder %s69, %s70
    %p79 = scmp.eq.s32.totalorder %s17, 0
    %p80 = por %p78, %p79
    %p81 = scmp.ne.s32.totalorder %s69, %s70
    %p82 = scmp.eq.s32.totalorder %s18, 1
    %p83 = por %p81, %p82
    %p85 = scmp.ne.s32.totalorder %s70, %s84
    %p86 = scmp.eq.s32.totalorder %s18, 0
    %p87 = por %p85, %p86
    %s89 = sadd.s32 %s88, 1
    %p92 = scmp.eq.s32.totalorder %s12, 1
    %p93 = scmp.ne.s32.totalorder %s88, %s90
    %p94 = scmp.eq.s32.totalorder %s12, 0
    %p95 = por %p93, %p94
    %p96 = scmp.ne.s32.totalorder %s88, %s90
    %p97 = scmp.eq.s32.totalorder %s17, 1
    %p98 = por %p96, %p97
    %p99 = scmp.ne.s32.totalorder %s90, %s91
    %p100 = scmp.eq.s32.totalorder %s17, 0
    %p101 = por %p99, %p100
    %p102 = scmp.ne.s32.totalorder %s90, %s91
    %p103 = scmp.eq.s32.totalorder %s18, 1
    %p104 = por %p102, %p103
    %p106 = scmp.ne.s32.totalorder %s91, %s105
    %p107 = scmp.eq.s32.totalorder %s18, 0
    %p108 = por %p106, %p107
    %s110 = sadd.s32 %s109, 1
    %p113 = scmp.eq.s32.totalorder %s12, 1
    %p114 = scmp.ne.s32.totalorder %s109, %s111
    %p115 = scmp.eq.s32.totalorder %s12, 0
    %p116 = por %p114, %p115
    %p117 = scmp.ne.s32.totalorder %s109, %s111
    %p118 = scmp.eq.s32.totalorder %s17, 1
    %p119 = por %p117, %p118
    %p120 = scmp.ne.s32.totalorder %s111, %s112
    %p121 = scmp.eq.s32.totalorder %s17, 0
    %p122 = por %p120, %p121
    %p123 = scmp.ne.s32.totalorder %s111, %s112
    %p124 = scmp.eq.s32.totalorder %s18, 1
    %p125 = por %p123, %p124
    %p127 = scmp.ne.s32.totalorder %s112, %s126
    %p128 = scmp.eq.s32.totalorder %s18, 0
    %p129 = por %p127, %p128
    %s131 = sadd.s32 %s130, 1
    %p134 = scmp.eq.s32.totalorder %s12, 1
    %p135 = scmp.ne.s32.totalorder %s130, %s132
    %p136 = scmp.eq.s32.totalorder %s12, 0
    %p137 = por %p135, %p136
    %p138 = scmp.ne.s32.totalorder %s130, %s132
    %p139 = scmp.eq.s32.totalorder %s17, 1
    %p140 = por %p138, %p139
    %p141 = scmp.ne.s32.totalorder %s132, %s133
    %p142 = scmp.eq.s32.totalorder %s17, 0
    %p143 = por %p141, %p142
    %p144 = scmp.ne.s32.totalorder %s132, %s133
    %p145 = scmp.eq.s32.totalorder %s18, 1
    %p146 = por %p144, %p145
    %p148 = scmp.ne.s32.totalorder %s133, %s147
    %p149 = scmp.eq.s32.totalorder %s18, 0
    %p150 = por %p148, %p149
    %s151 = ssub.s32 %s12, %s19
    %p152 = scmp.eq.s32.totalorder %s151, 0
    %s154 = sadd.s32 %s153, 1
    %s155 = scalar_select %p152, %s153, %s154
    %p158 = pneg %p152
    %p159 = scmp.eq.s32.totalorder %s12, 1
    %p160 = por %p158, %p159
    %p161 = scmp.ne.s32.totalorder %s153, %s156
    %p162 = scmp.eq.s32.totalorder %s12, 0
    %p163 = por %p161, %p162
    %p164 = scmp.ne.s32.totalorder %s153, %s156
    %p165 = scmp.eq.s32.totalorder %s17, 1
    %p166 = por %p164, %p165
    %p167 = scmp.ne.s32.totalorder %s156, %s157
    %p168 = scmp.eq.s32.totalorder %s17, 0
    %p169 = por %p167, %p168
    %p170 = scmp.ne.s32.totalorder %s156, %s157
    %p171 = scmp.eq.s32.totalorder %s18, 1
    %p172 = por %p170, %p171
    %p174 = scmp.ne.s32.totalorder %s157, %s173
    %p175 = scmp.eq.s32.totalorder %s18, 0
    %p176 = por %p174, %p175
    %p177 = scmp.le.s32.totalorder 1, %s12
    %p178 = scmp.lt.s32.totalorder %s12, 3
    %p179 = pnand %p177, %p178
    %p180 = pneg %p179
    // Predicated region
    $region9: #{ngcnet_forward.1} parent=5 // pred_check
      _
    $region10: #{ngcnet_forward.1} parent=5 // pred_check_branch
      %182 = sbr.rel (%p179) target = $region12
    $region11: #{ngcnet_forward.1} parent=5 // pred_region
      %s183 = ssub.s32 %s12, 1
      // Predicated region
      $region13: #{ngcnet_forward.1} parent=11 // pred_check
        %p184 = pneg %p59
      $region14: #{ngcnet_forward.1} parent=11 // pred_check_branch
        %186 = sbr.rel (%p184) target = $region16
      $region15: #{ngcnet_forward.1} parent=11 // pred_region
        _
      $region16: #{ngcnet_forward.1} parent=11 // pred_fallthru
        _
      // Predicated region
      $region17: #{ngcnet_forward.1} parent=11 // pred_check
        %p187 = pneg %p80
      $region18: #{ngcnet_forward.1} parent=11 // pred_check_branch
        %189 = sbr.rel (%p187) target = $region20
      $region19: #{ngcnet_forward.1} parent=11 // pred_region
        _
      $region20: #{ngcnet_forward.1} parent=11 // pred_fallthru
        _
      // Predicated region
      $region21: #{ngcnet_forward.1} parent=11 // pred_check
        %p190 = pneg %p101
      $region22: #{ngcnet_forward.1} parent=11 // pred_check_branch
        %192 = sbr.rel (%p190) target = $region24
      $region23: #{ngcnet_forward.1} parent=11 // pred_region
        _
      $region24: #{ngcnet_forward.1} parent=11 // pred_fallthru
        _
      // Predicated region
      $region25: #{ngcnet_forward.1} parent=11 // pred_check
        %p193 = pneg %p122
      $region26: #{ngcnet_forward.1} parent=11 // pred_check_branch
        %195 = sbr.rel (%p193) target = $region28
      $region27: #{ngcnet_forward.1} parent=11 // pred_region
        _
      $region28: #{ngcnet_forward.1} parent=11 // pred_fallthru
        _
      // Predicated region
      $region29: #{ngcnet_forward.1} parent=11 // pred_check
        %p196 = pneg %p143
      $region30: #{ngcnet_forward.1} parent=11 // pred_check_branch
        %198 = sbr.rel (%p196) target = $region32
      $region31: #{ngcnet_forward.1} parent=11 // pred_region
        _
      $region32: #{ngcnet_forward.1} parent=11 // pred_fallthru
        _
    $region12: #{ngcnet_forward.1} parent=5 // pred_fallthru
      _
    %p199 = scmp.lt.s32.totalorder %s12, 2
    // Predicated region
    $region33: #{ngcnet_forward.1} parent=5 // pred_check
      %p200 = pneg %p199
    $region34: #{ngcnet_forward.1} parent=5 // pred_check_branch
      %202 = sbr.rel (%p200) target = $region36
    $region35: #{ngcnet_forward.1} parent=5 // pred_region
      // Predicated region
      $region37: #{ngcnet_forward.1} parent=35 // pred_check
        %p203 = pneg %p32
      $region38: #{ngcnet_forward.1} parent=35 // pred_check_branch
        %205 = sbr.rel (%p203) target = $region40
      $region39: #{ngcnet_forward.1} parent=35 // pred_region
        %p206 = scmp.lt.s32.totalorder %s12, 1
        %s207 = scalar_select %p206, %s12, 1
        %s208 = smul.addr %s207, 8
        %s209 = scalar_lea.vmem %s0, %s208
      $region40: #{ngcnet_forward.1} parent=35 // pred_fallthru
        _
    $region36: #{ngcnet_forward.1} parent=5 // pred_fallthru
      _
    %p210 = scmp.le.s32.totalorder 1, %s12
    %p211 = scmp.lt.s32.totalorder %s12, 3
    %p212 = pnand %p210, %p211
    %p213 = pneg %p212
    // Predicated region
    $region41: #{ngcnet_forward.1} parent=5 // pred_check
      _
    $region42: #{ngcnet_forward.1} parent=5 // pred_check_branch
      %215 = sbr.rel (%p212) target = $region44
    $region43: #{ngcnet_forward.1} parent=5 // pred_region
      %s216 = ssub.s32 %s12, 1
      %p217 = scmp.lt.s32.totalorder %s17, 1
      %s218 = scalar_select %p217, %s17, 1
      %s219 = smul.addr %s218, 8
      %s220 = scalar_lea.vmem %s0, %s219
      %p221 = pneg %p38
      %p222 = pneg %p35
      %p223 = pneg %p59
      %p224 = pneg %p56
      %p225 = pneg %p80
      %p226 = pneg %p77
      %p227 = pneg %p101
      %p228 = pneg %p98
      %p229 = pneg %p122
      %p230 = pneg %p119
      %p231 = pneg %p143
      %p232 = pneg %p140
      %p233 = pneg %p169
      %p234 = pneg %p166
      %p235 = scmp.lt.s32.totalorder %s17, 1
      %s236 = scalar_select %p235, %s17, 1
      %s237 = smul.addr %s236, 8
      %s238 = scalar_lea.vmem %s6, %s237
      %p239 = scmp.lt.s32.totalorder %s17, 1
      %s240 = scalar_select %p239, %s17, 1
      %s241 = smul.addr %s240, 8
      %s242 = scalar_lea.vmem %s0, %s241
      %p243 = scmp.lt.s32.totalorder %s17, 1
      %s244 = scalar_select %p243, %s17, 1
      %s245 = smul.addr %s244, 8
      %s246 = scalar_lea.vmem %s6, %s245
      %v248 = vld [vmem:[%s5] sm:$0x1]
      %v249 = vld [vmem:[%s5 + $0x1] sm:$0x1]
      %v250 = vld [vmem:[%s5 + $0x2] sm:$0x1]
      %v251 = vld [vmem:[%s5 + $0x3] sm:$0x1]
      %v252 = vld [vmem:[%s5 + $0x4] sm:$0x1]
      %v253 = vld [vmem:[%s5 + $0x5] sm:$0x1]
      %v254 = vld [vmem:[%s242] sm:$0xff]
      %v255 = vcvt.f32.s32.to.zero.pseudo %v254
      %v256 = vlaneseq
      %v257 = vand.u32 %v256, 127
      %258 = vset.pattern.permute.xlu0 0
      %259 = vperm.xlu0 %258, %v255
      %v260 = vpop.permute.xlu0 %259
      %vm261 = vcmp.eq.s32.totalorder %v260, %v257
      %v262 = vsel %vm261, 1, 0
      %v263 = vcvt.s32.f32 %v262
      %v264 = vpack.c.bf16 %v263, %v263
      %v265 = vld [vmem:[%s1] sm:$0xf]
      %v266 = vld [vmem:[%s1 + $0x4] sm:$0xf]
      %v267 = vperm.slane %v248, 0
      %v270 = vunpack.c.l.b16 %v265
      %v271 = vunpack.c.l.b16 %v266
      %v272 = vpack.c.b16 %v271, %v270
      %vm274 = vcmask 130048
      %v276 = vsel %vm274, %v264, 0
      %278 = vmatpush.bf16.msra.mxu0 0
      %279 = vmatpush.bf16.msra.mxu0 0
      %280 = vmatpush.bf16.msra.mxu0 0
      %281 = vmatpush.bf16.msra.mxu0 0
      %282 = vmatpush.bf16.msra.mxu0 0
      %283 = vmatpush.bf16.msra.mxu0 0
      %284 = vmatpush.bf16.msra.mxu0 0
      %285 = vmatpush.bf16.msra.mxu0 %v272
      %286 = vmatmul.bf16.gmra.mxu0 %v276
      %v287 = vpop.f32.mrf.mxu0
      %v288 = vadd.f32 %v267, %v287
      %v289 = vpop.f32.mrf.mxu0
      %290 = vdwg.mxu0
      %292 = vset.pattern.permute.xlu0 1
      %293 = vperm.xlu0 %292, %v254
      %v294 = vpop.permute.xlu0 %293
      %v296 = vmul.f32 %v294, %v288
      %v297 = vsub.f32 1.0, %v254
      %299 = vset.pattern.permute.xlu0 1
      %300 = vperm.xlu0 %299, %v297
      %v301 = vpop.permute.xlu0 %300
      %v303 = vmul.f32 %v301, %v288
      %305 = vrot.lane.b32.xlu0 %v303, 96
      %v306 = vpop.permute.xlu0 %305
      %v308 = vadd.f32 %v296, %v306
      %v309 = vpack.c.bf16 %v308, %v308
      %v310 = vld [vmem:[%s2] sm:$0xf]
      %v311 = vld [vmem:[%s2 + $0x4] sm:$0xf]
      %v312 = vld [vmem:[%s2 + $0x8] sm:$0xf]
      %v313 = vld [vmem:[%s2 + $0xc] sm:$0xf]
      %v314 = vperm.slane %v249, 0
      %v319 = vunpack.c.l.b16 %v310
      %v320 = vunpack.c.l.b16 %v311
      %v321 = vunpack.c.l.b16 %v312
      %v322 = vunpack.c.l.b16 %v313
      %v323 = vpack.c.b16 %v320, %v319
      %v324 = vpack.c.b16 %v322, %v321
      %vm327 = vcmask 261120
      %v329 = vsel %vm327, %v309, 0
      %331 = vmatpush.bf16.msra.mxu0 0
      %332 = vmatpush.bf16.msra.mxu0 0
      %333 = vmatpush.bf16.msra.mxu0 0
      %334 = vmatpush.bf16.msra.mxu0 0
      %335 = vmatpush.bf16.msra.mxu0 0
      %336 = vmatpush.bf16.msra.mxu0 0
      %337 = vmatpush.bf16.msra.mxu0 %v324
      %338 = vmatpush.bf16.msra.mxu0 %v323
      %339 = vmatmul.bf16.gmra.mxu0 %v329
      %v340 = vpop.f32.mrf.mxu0
      %v341 = vadd.f32 %v314, %v340
      %v342 = vpop.f32.mrf.mxu0
      %343 = vdwg.mxu0
      %v344 = vmax.f32 %v341, 0.0
      %v345 = vmul.f32 %v254, 2.0
      %v346 = vmul.f32 %v254, 4.0
      %v347 = vmul.f32 %v254, 8.0
      %348 = vrot.lane.b32.xlu0 %v254, 126
      %v349 = vpop.permute.xlu0 %348
      %352 = vrot.lane.b32.xlu0 %v345, 1
      %v353 = vpop.permute.xlu0 %352
      %356 = vrot.lane.b32.xlu0 %v346, 4
      %v357 = vpop.permute.xlu0 %356
      %360 = vrot.lane.b32.xlu0 %v347, 7
      %v361 = vpop.permute.xlu0 %360
      %vm363 = vcmask 23552
      %v364 = vsel %vm363, %v349, %v353
      %vm365 = vcmask 48128
      %v366 = vsel %vm365, %v364, %v357
      %vm367 = vcmask 72704
      %v368 = vsel %vm367, %v366, %v361
      %v369 = vadd.f32 %v368, 1.5707964
      %371 = vrot.lane.b32.xlu0 %v369, 12
      %v372 = vpop.permute.xlu0 %371
      %vm374 = vcmask 97280
      %v375 = vsel %vm374, %v368, %v372
      %v376 = vand.u32 2147483647, %v375
      %vm377 = vcmp.le.f32.partialorder %v376, 0.7853982
      %vm378 = vcmp.lt.s32.totalorder %v375, 0
      %v379 = vand.u32 %v375, 2139095040
      %v380 = vshrl.u32 %v379, 23
      %v381 = vsub.s32 %v380, 127
      %v382 = vand.u32 2147483647, %v375
      %v383 = vand.u32 %v382, 8388607
      %v384 = vor.u32 %v383, 8388608
      %v385 = vsub.s32 0, %v384
      %v386 = vadd.s32 %v381, 1
      %vm387 = vcmp.gt.s32.totalorder %v386, 0
      %v388 = vsel %vm387, %v386, 0
      %v389 = vshrl.u32 %v388, 5
      %v390 = vand.u32 %v388, 31
      %v391 = vsub.s32 32, %v390
      %v392 = vshrl.u32 683565275, %v391
      %v393 = vshll.u32 683565275, %v390
      %v394 = vshrl.u32 2475754826, %v391
      %v395 = vor.u32 %v393, %v394
      %v396 = vshll.u32 2475754826, %v390
      %v397 = vshrl.u32 2131351028, %v391
      %v398 = vor.u32 %v396, %v397
      %v399 = vshll.u32 2131351028, %v390
      %v400 = vshrl.u32 2102212464, %v391
      %v401 = vor.u32 %v399, %v400
      %v402 = vshll.u32 2102212464, %v390
      %v403 = vshrl.u32 920167782, %v391
      %v404 = vor.u32 %v402, %v403
      %v405 = vshll.u32 920167782, %v390
      %v406 = vshrl.u32 1326507024, %v391
      %v407 = vor.u32 %v405, %v406
      %vm408 = vcmp.lt.s32.totalorder %v389, 1
      %vm409 = vcmp.lt.s32.totalorder %v389, 2
      %vm410 = vcmp.lt.s32.totalorder %v389, 3
      %vm411 = vcmp.lt.s32.totalorder %v389, 4
      %v412 = vsel %vm408, %v392, %v395
      %v413 = vsel %vm411, %v401, 2102212464
      %v414 = vsel %vm410, %v398, %v413
      %v415 = vsel %vm409, %v412, %v414
      %v416 = vsel %vm408, %v395, %v398
      %v417 = vsel %vm411, %v404, 920167782
      %v418 = vsel %vm410, %v401, %v417
      %v419 = vsel %vm409, %v416, %v418
      %v420 = vsel %vm408, %v398, %v401
      %v421 = vsel %vm411, %v407, 1326507024
      %v422 = vsel %vm410, %v404, %v421
      %v423 = vsel %vm409, %v420, %v422
      %v424 = vshll.u32 %v384, 8
      %v425 = vand.u32 %v424, 65535
      %v426 = vshrl.u32 %v424, 16
      %v427 = vand.u32 %v423, 65535
      %v428 = vshrl.u32 %v423, 16
      %v429 = vmul.u32 %v425, %v427
      %v430 = vmul.u32 %v425, %v428
      %v431 = vmul.u32 %v426, %v427
      %v432 = vmul.u32 %v426, %v428
      %v433 = vshll.u32 %v430, 16
      %v434 = vshrl.u32 %v430, 16
      %v435 = vshll.u32 %v431, 16
      %v436 = vshrl.u32 %v431, 16
      %vm437 = vc.u32 %v429, %v433
      %v438 = vsel %vm437, 1, 0
      %v439 = vadd.s32 %v429, %v433
      %v440 = vadd.s32 %v432, %v438
      %vm441 = vc.u32 %v439, %v435
      %v442 = vsel %vm441, 1, 0
      %v443 = vadd.s32 %v439, %v435
      %v444 = vadd.s32 %v440, %v442
      %v445 = vadd.s32 %v444, %v434
      %v446 = vadd.s32 %v445, %v436
      %v447 = vand.u32 %v424, 65535
      %v448 = vshrl.u32 %v424, 16
      %v449 = vand.u32 %v419, 65535
      %v450 = vshrl.u32 %v419, 16
      %v451 = vmul.u32 %v447, %v449
      %v452 = vmul.u32 %v447, %v450
      %v453 = vmul.u32 %v448, %v449
      %v454 = vmul.u32 %v448, %v450
      %v455 = vshll.u32 %v452, 16
      %v456 = vshrl.u32 %v452, 16
      %v457 = vshll.u32 %v453, 16
      %v458 = vshrl.u32 %v453, 16
      %vm459 = vc.u32 %v451, %v455
      %v460 = vsel %vm459, 1, 0
      %v461 = vadd.s32 %v451, %v455
      %v462 = vadd.s32 %v454, %v460
      %vm463 = vc.u32 %v461, %v457
      %v464 = vsel %vm463, 1, 0
      %v465 = vadd.s32 %v461, %v457
      %v466 = vadd.s32 %v462, %v464
      %v467 = vadd.s32 %v466, %v456
      %v468 = vadd.s32 %v467, %v458
      %v469 = vmul.u32 %v424, %v415
      %v470 = vadd.s32 %v446, %v465
      %vm471 = vc.u32 %v446, %v465
      %v472 = vadd.s32 %v468, 1
      %v473 = vsel %vm471, %v472, %v468
      %v474 = vadd.s32 %v469, %v473
      %v475 = vadd.s32 %v474, 536870912
      %v476 = vshrl.u32 %v475, 30
      %v477 = vshll.u32 %v476, 30
      %v478 = vsub.s32 %v474, %v477
      %vm479 = vcmp.lt.s32.totalorder %v478, 0
      %v480 = vsub.s32 0, %v478
      %v481 = vsel %vm479, %v480, %v478
      %v482 = vclz %v481
      %v483 = vsub.s32 %v482, 2
      %vm484 = vcmp.gt.s32.totalorder 0, %v483
      %v485 = vsel %vm484, 0, %v483
      %v486 = vsub.s32 32, %v485
      %v487 = vshll.u32 %v478, %v485
      %v488 = vshrl.u32 %v470, %v486
      %v489 = vor.u32 %v487, %v488
      %v490 = vsub.s32 4294967266, %v485
      %v491 = vadd.s32 %v490, 127
      %v492 = vshll.u32 %v491, 23
      %v493 = vor.u32 4788187, %v492
      %v494 = vand.u32 2147483647, %v493
      %v496 = vcvt.s32.f32 %v489
      %v497 = vmul.f32 %v496, %v494
      %v498 = vxor.u32 %v497, 2147483648
      %v499 = vsel %vm378, %v498, %v497
      %v500 = vsub.s32 4, %v476
      %v501 = vsel %vm378, %v500, %v476
      %v502 = vsel %vm377, %v375, %v499
      %v503 = vsel %vm377, 0, %v501
      %v504 = vmul.f32 %v502, %v502
      %v505 = vmul.f32 %v504, -0.001358992
      %v506 = vadd.f32 %v505, 0.041655596
      %v507 = vmul.f32 %v504, %v506
      %v508 = vadd.f32 %v507, -0.4999988
      %v509 = vmul.f32 %v504, %v508
      %v510 = vadd.f32 1.0, %v509
      %v511 = vmul.f32 %v502, %v502
      %v512 = vmul.f32 %v511, -0.00019511016
      %v513 = vadd.f32 %v512, 0.008332121
      %v514 = vmul.f32 %v511, %v513
      %v515 = vadd.f32 %v514, -0.16666654
      %v516 = vmul.f32 %v511, %v515
      %v517 = vadd.f32 %v516, 1.0
      %v518 = vmul.f32 %v517, %v502
      %vm519 = vweird.f32 %v375
      %v520 = vadd.s32 %v503, 3
      %v521 = vand.u32 %v520, 3
      %vm522 = vcmp.lt.s32.totalorder %v521, 2
      %vm523 = vcmp.eq.s32.totalorder %v521, 0
      %v524 = vxor.u32 %v518, 2147483648
      %v525 = vsel %vm523, %v510, %v524
      %vm526 = vcmp.eq.s32.totalorder %v521, 2
      %v527 = vxor.u32 %v510, 2147483648
      %v528 = vsel %vm526, %v527, %v518
      %v529 = vsel %vm522, %v525, %v528
      %v530 = vsel %vm519, nan, %v529
      %531 = vrot.lane.b32.xlu0 %v254, 62
      %v532 = vpop.permute.xlu0 %531
      %535 = vrot.lane.b32.xlu0 %v530, 67
      %v536 = vpop.permute.xlu0 %535
      %vm538 = vcmask 523264
      %v539 = vsel %vm538, %v344, %v532
      %vm540 = vcmask 547840
      %v541 = vsel %vm540, %v539, %v536
      %v542 = vpack.c.bf16 %v541, %v541
      %v543 = vld [vmem:[%s3] sm:$0xf]
      %v544 = vld [vmem:[%s3 + $0x4] sm:$0xf]
      %v545 = vld [vmem:[%s3 + $0x8] sm:$0xf]
      %v546 = vld [vmem:[%s3 + $0xc] sm:$0xf]
      %v547 = vld [vmem:[%s3 + $0x10] sm:$0xf]
      %v548 = vld [vmem:[%s3 + $0x14] sm:$0xf]
      %v549 = vld [vmem:[%s3 + $0x18] sm:$0xf]
      %v550 = vld [vmem:[%s3 + $0x1c] sm:$0xf]
      %v551 = vld [vmem:[%s3 + $0x20] sm:$0xf]
      %v552 = vld [vmem:[%s3 + $0x24] sm:$0xf]
      %v553 = vld [vmem:[%s3 + $0x28] sm:$0xf]
      %v554 = vld [vmem:[%s3 + $0x2c] sm:$0x3]
      %v555 = vperm.slane %v250, 0
      %v568 = vunpack.c.l.b16 %v543
      %v569 = vunpack.c.l.b16 %v544
      %v570 = vunpack.c.l.b16 %v545
      %v571 = vunpack.c.l.b16 %v546
      %v572 = vunpack.c.l.b16 %v547
      %v573 = vunpack.c.l.b16 %v548
      %v574 = vunpack.c.l.b16 %v549
      %v575 = vunpack.c.l.b16 %v550
      %v576 = vunpack.c.l.b16 %v551
      %v577 = vunpack.c.l.b16 %v552
      %v578 = vunpack.c.l.b16 %v553
      %v579 = vunpack.c.l.b16 %v554
      %v580 = vpack.c.b16 %v569, %v568
      %v581 = vpack.c.b16 %v571, %v570
      %v582 = vpack.c.b16 %v573, %v572
      %v583 = vpack.c.b16 %v575, %v574
      %v584 = vpack.c.b16 %v577, %v576
      %v585 = vpack.c.b16 %v579, %v578
      %vm591 = vcmask 744448
      %v593 = vsel %vm591, %v542, 0
      %vm595 = vcmask 1044480
      %vm596 = vcmask 1045504
      %v597 = vsel %vm595, 4294967295, 65535
      %v598 = vsel %vm596, %v597, 0
      %v600 = vand.u32 %v585, %v598
      %602 = vmatpush.bf16.msra.mxu0 0
      %603 = vmatpush.bf16.msra.mxu0 0
      %604 = vmatpush.bf16.msra.mxu0 %v600
      %605 = vmatpush.bf16.msra.mxu0 %v584
      %606 = vmatpush.bf16.msra.mxu0 %v583
      %607 = vmatpush.bf16.msra.mxu0 %v582
      %608 = vmatpush.bf16.msra.mxu0 %v581
      %609 = vmatpush.bf16.msra.mxu0 %v580
      %610 = vmatmul.bf16.gmra.mxu0 %v593
      %v611 = vpop.f32.mrf.mxu0
      %v612 = vadd.f32 %v555, %v611
      %v613 = vpop.f32.mrf.mxu0
      %614 = vdwg.mxu0
      %v615 = vmax.f32 %v612, 0.0
      %v616 = vpack.c.bf16 %v615, %v615
      %v617 = vld [vmem:[%s4] sm:$0xf]
      %v618 = vld [vmem:[%s4 + $0x4] sm:$0xf]
      %v619 = vld [vmem:[%s4 + $0x8] sm:$0xf]
      %v620 = vld [vmem:[%s4 + $0xc] sm:$0xf]
      %v621 = vld [vmem:[%s4 + $0x10] sm:$0xf]
      %v622 = vld [vmem:[%s4 + $0x14] sm:$0xf]
      %v623 = vld [vmem:[%s4 + $0x18] sm:$0xf]
      %v624 = vld [vmem:[%s4 + $0x1c] sm:$0xf]
      %v625 = vperm.slane %v251, 0
      %v634 = vunpack.c.l.b16 %v617
      %v635 = vunpack.c.l.b16 %v618
      %v636 = vunpack.c.l.b16 %v619
      %v637 = vunpack.c.l.b16 %v620
      %v638 = vunpack.c.l.b16 %v621
      %v639 = vunpack.c.l.b16 %v622
      %v640 = vunpack.c.l.b16 %v623
      %v641 = vunpack.c.l.b16 %v624
      %v642 = vpack.c.b16 %v635, %v634
      %v643 = vpack.c.b16 %v637, %v636
      %v644 = vpack.c.b16 %v639, %v638
      %v645 = vpack.c.b16 %v641, %v640
      %v651 = vsel %vm538, %v616, 0
      %653 = vmatpush.bf16.msra.mxu0 0
      %654 = vmatpush.bf16.msra.mxu0 0
      %655 = vmatpush.bf16.msra.mxu0 0
      %656 = vmatpush.bf16.msra.mxu0 0
      %657 = vmatpush.bf16.msra.mxu0 %v645
      %658 = vmatpush.bf16.msra.mxu0 %v644
      %659 = vmatpush.bf16.msra.mxu0 %v643
      %660 = vmatpush.bf16.msra.mxu0 %v642
      %661 = vmatmul.bf16.gmra.mxu0 %v651
      %v662 = vpop.f32.mrf.mxu0
      %v663 = vadd.f32 %v625, %v662
      %v664 = vpop.f32.mrf.mxu0
      %665 = vdwg.mxu0
      %v666 = vmax.f32 %v663, 0.0
      %v667 = vperm.slane %v252, 0
      %v668 = vmul.f32 %v666, %v667
      %v669 = vsel %vm538, %v668, 0.0
      %670 = vadd.xlane.f32.xlu0 %v669
      %v671 = vpop.xlane.xlu0 %670
      %v672 = vperm.slane %v253, 0
      %v673 = vadd.f32 %v671, %v672
      %vm674 = vcmask 7168
      %675 = vst.msk [vmem:[%s246] sm:$0xff] %vm674, %v673
      %p676 = scmp.lt.s32.totalorder %s17, 1
      %s677 = scalar_select %p676, %s17, 1
      %s678 = smul.addr %s677, 8
      %s679 = scalar_lea.vmem %s6, %s678
      // Predicated region
      $region45: #{ngcnet_forward.1} parent=43 // pred_check
        %p680 = pneg %p166
      $region46: #{ngcnet_forward.1} parent=43 // pred_check_branch
        %682 = sbr.rel (%p680) target = $region48
      $region47: #{ngcnet_forward.1} parent=43 // pred_region
        _
      $region48: #{ngcnet_forward.1} parent=43 // pred_fallthru
        _
    $region44: #{ngcnet_forward.1} parent=5 // pred_fallthru
      _
    %p683 = scmp.le.s32.totalorder 2, %s12
    // Predicated region
    $region49: #{ngcnet_forward.1} parent=5 // pred_check
      %p684 = pneg %p683
    $region50: #{ngcnet_forward.1} parent=5 // pred_check_branch
      %686 = sbr.rel (%p684) target = $region52
    $region51: #{ngcnet_forward.1} parent=5 // pred_region
      %s687 = ssub.s32 %s12, 2
      // Predicated region
      $region53: #{ngcnet_forward.1} parent=51 // pred_check
        %p688 = pneg %p172
      $region54: #{ngcnet_forward.1} parent=51 // pred_check_branch
        %690 = sbr.rel (%p688) target = $region56
      $region55: #{ngcnet_forward.1} parent=51 // pred_region
        %p691 = scmp.lt.s32.totalorder %s18, 1
        %s692 = scalar_select %p691, %s18, 1
        %s693 = smul.addr %s692, 8
        %s694 = scalar_lea.vmem %s6, %s693
      $region56: #{ngcnet_forward.1} parent=51 // pred_fallthru
        _
    $region52: #{ngcnet_forward.1} parent=5 // pred_fallthru
      _
  $region6: #{ngcnet_forward.1} parent=0 // loop_footer
    %s16 = sadd.s32 1, %s12
  $region7: #{ngcnet_forward.1} parent=0 // loop_footer_branch
    %11 = sbr.rel target = $region3
  $region8: #{ngcnet_forward.1} parent=0 // loop_exit
    _

</llo_original>
